<compile_context>
chip_gen: v5e
topology: v5e:2x2
jax: 0.10.0
libtpu: 0.0.40
codegen_flags: <defaults>
</compile_context>

<pallas_src>
import functools

import jax
import jax.numpy as jnp
from jax.experimental import pallas as pl
from jax.experimental.pallas import tpu as pltpu

_LANE = 128          # lane width / halo granule
_MAX_L_TILE = 1024   # output-length tile per grid step (multiple of _LANE)
_MAX_NB = 8          # max batch samples per grid step


def _round_up(a, b):
    return (a + b - 1) // b * b


def _bottleneck_kernel(x_ref, xh_ref, w1_ref, b1_ref, w2_ref, b2_ref,
                       w3_ref, b3_ref, o_ref, *scratch,
                       K, P, L, L_tile, Cb, fused):
    """One (Nb, L_tile) output tile.  Channels on sublanes, length on lanes."""
    W = L_tile + _LANE                      # compute width incl. halo
    Nb = x_ref.shape[0]
    g0 = pl.program_id(1) * L_tile          # global column offset of this tile

    # conv2's zero padding lives at global columns outside [P, P+L); conv1's
    # bias would otherwise leak nonzeros into them, so mask h1 there.  The
    # mask only depends on the grid step -> hoisted out of the sample loop.
    col = jax.lax.broadcasted_iota(jnp.int32, (Cb, W), 1) + g0
    pad_mask = (col >= P) & (col < P + L)

    def body(i, carry):
        # (Cin, W) input slab = main L-tile ++ 128-lane halo.
        x = jnp.concatenate([x_ref[i], xh_ref[i]], axis=-1).astype(jnp.bfloat16)

        # conv1 (1x1) + bias + ReLU: bf16 MXU inputs, f32 accumulate/VPU math.
        h1 = jnp.dot(w1_ref[...], x, preferred_element_type=jnp.float32)
        h1 = jnp.maximum(h1 + b1_ref[...], 0.0)
        h1 = jnp.where(pad_mask, h1, 0.0)          # conv2 zero padding

        if fused:
            # Large Cb: one MXU push with a K*Cb contraction.  The K rolled
            # copies are staged through VMEM scratch so each copy's live range
            # ends at its store (bounds vreg pressure).
            hcat_ref = scratch[0]
            for k in range(K):
                hk = h1 if k == 0 else pltpu.roll(h1, shift=W - k, axis=1)
                hcat_ref[pl.ds(k * Cb, Cb), :] = hk.astype(jnp.bfloat16)
            h2 = jnp.dot(w2_ref[...], hcat_ref[...],
                         preferred_element_type=jnp.float32)
        else:
            # Small Cb: K accumulated dots against lane-rolled copies (roll is
            # XLU work, off the vld/vst critical path); no h_cat materialized.
            h2 = jnp.dot(w2_ref[0], h1.astype(jnp.bfloat16),
                         preferred_element_type=jnp.float32)
            for k in range(1, K):
                hk = pltpu.roll(h1, shift=W - k, axis=1).astype(jnp.bfloat16)
                h2 = h2 + jnp.dot(w2_ref[k], hk,
                                  preferred_element_type=jnp.float32)

        h2 = jnp.maximum(h2 + b2_ref[...], 0.0)
        h2 = h2[:, :L_tile].astype(jnp.bfloat16)   # drop halo tail (aligned slice)

        # conv3 (1x1), no activation.
        y = jnp.dot(w3_ref[...], h2, preferred_element_type=jnp.float32)
        o_ref[i] = (y + b3_ref[...]).astype(o_ref.dtype)
        return carry

    jax.lax.fori_loop(0, Nb, body, 0, unroll=True)


def bottleneck_forward(x_ncw, params, *, kernel_size, padding, out_dtype=None):
    """x_ncw: (N, Cin, L) -> (N, Cout, L_out), PyTorch Conv1d NCW semantics.

    Accepts f32 or bf16 `x_ncw`; `out_dtype` defaults to x's dtype (pass
    jnp.bfloat16 when the consumer tolerates it to halve output HBM traffic).
    """
    w1, b1, w2, b2, w3, b3 = params
    N, Cin, L = x_ncw.shape
    Cb = w1.shape[0]
    Cout = w3.shape[0]
    K, P = kernel_size, padding
    L_out = L + 2 * P - K + 1
    if L_out <= 0:
        raise ValueError(f"degenerate geometry: L_out={L_out} (L={L}, K={K}, P={P})")
    if K - 1 > _LANE:
        raise ValueError(f"kernel_size={K} exceeds single-granule halo ({_LANE + 1})")
    out_dtype = x_ncw.dtype if out_dtype is None else out_dtype

    # ---- geometry: lane-dense L_out, L tiles, 128-lane halo ----------------
    L_out_pad = _round_up(L_out, _LANE)
    L_tile = min(L_out_pad, _MAX_L_TILE)
    L_grid = _round_up(L_out_pad, L_tile)
    num_lt = L_grid // L_tile
    L_in = L_grid + _LANE                      # covers every tile's halo
    halo_blocks_per_tile = L_tile // _LANE

    in_bytes = jnp.dtype(x_ncw.dtype).itemsize
    out_bytes = jnp.dtype(out_dtype).itemsize

    # ---- batch tiling: amortize per-step pipeline overhead -----------------
    per_sample_in = Cin * (L_tile + _LANE) * in_bytes
    Nb = max(1, min(N, _MAX_NB, (512 * 1024) // max(1, per_sample_in)))
    N_pad = _round_up(N, Nb)

    # Zero-pad once in the wrapper: batch up to N_pad, conv2 padding (P) plus
    # lane alignment along L (x placed at column offset P).
    x_pad = jnp.zeros((N_pad, Cin, L_in), x_ncw.dtype)
    x_pad = x_pad.at[:N, :, P:P + L].set(x_ncw)

    # ---- weights: bf16 MXU inputs, f32 (C, 1) bias columns -----------------
    bf16 = jnp.bfloat16
    fused = Cb >= 64   # fused K*Cb-contraction dot vs K accumulated dots
    w1_2d = w1[:, :, 0].astype(bf16)                                    # (Cb, Cin)
    if fused:
        # w2f[co, k*Cb + ci] = w2[co, ci, k]  (matches scratch stacking order)
        w2_in = jnp.transpose(w2, (0, 2, 1)).reshape(Cb, K * Cb).astype(bf16)
        w2_spec = pl.BlockSpec((Cb, K * Cb), lambda n, lt: (0, 0))
        scratch_shapes = [pltpu.VMEM((K * Cb, L_tile + _LANE), bf16)]
    else:
        # w2t[k] = w2[:, :, k]
        w2_in = jnp.transpose(w2, (2, 0, 1)).astype(bf16)               # (K, Cb, Cb)
        w2_spec = pl.BlockSpec((K, Cb, Cb), lambda n, lt: (0, 0, 0))
        scratch_shapes = []
    w3_2d = w3[:, :, 0].astype(bf16)                                    # (Cout, Cb)
    b1_2d = b1.reshape(Cb, 1).astype(jnp.float32)
    b2_2d = b2.reshape(Cb, 1).astype(jnp.float32)
    b3_2d = b3.reshape(Cout, 1).astype(jnp.float32)

    # ---- VMEM budget (double-buffered I/O + in-kernel live values) ---------
    W_comp = L_tile + _LANE
    vmem_est = (
        2 * Nb * Cin * W_comp * in_bytes            # input main+halo, x2 buffers
        + 2 * Nb * Cout * L_tile * out_bytes        # output, x2 buffers
        + 2 * 2 * (Cb * Cin + K * Cb * Cb + Cout * Cb)  # bf16 weights, x2
        + 2 * 4 * (2 * Cb + Cout)                   # f32 biases, x2
        + W_comp * (Cin * 4 + Cb * 18) + L_tile * (Cb * 2 + Cout * 4)
        + (K * Cb * W_comp * 2 if fused else 0)     # fused-path scratch
    )
    vmem_limit = int(min(48 * 1024 * 1024, max(32 * 1024 * 1024, 2 * vmem_est)))

    kernel = functools.partial(
        _bottleneck_kernel, K=K, P=P, L=L, L_tile=L_tile, Cb=Cb, fused=fused)

    out_pad = pl.pallas_call(
        kernel,
        out_shape=jax.ShapeDtypeStruct((N_pad, Cout, L_grid), out_dtype),
        grid_spec=pltpu.PrefetchScalarGridSpec(
            num_scalar_prefetch=0,
            grid=(N_pad // Nb, num_lt),
            in_specs=[
                # main L tile of x
                pl.BlockSpec((Nb, Cin, L_tile), lambda n, lt: (n, 0, lt)),
                # 128-lane halo: the 128-column granule just past this tile
                pl.BlockSpec((Nb, Cin, _LANE),
                             lambda n, lt: (n, 0, (lt + 1) * halo_blocks_per_tile)),
                pl.BlockSpec((Cb, Cin), lambda n, lt: (0, 0)),
                pl.BlockSpec((Cb, 1), lambda n, lt: (0, 0)),
                w2_spec,
                pl.BlockSpec((Cb, 1), lambda n, lt: (0, 0)),
                pl.BlockSpec((Cout, Cb), lambda n, lt: (0, 0)),
                pl.BlockSpec((Cout, 1), lambda n, lt: (0, 0)),
            ],
            out_specs=pl.BlockSpec((Nb, Cout, L_tile), lambda n, lt: (n, 0, lt)),
            scratch_shapes=scratch_shapes,
        ),
        compiler_params=pltpu.CompilerParams(
            dimension_semantics=("parallel", "parallel"),
            vmem_limit_bytes=vmem_limit),
    )(x_pad, x_pad, w1_2d, b1_2d, w2_in, b2_2d, w3_2d, b3_2d)

    return out_pad[:N, :, :L_out]


def _reference_f32(x_ncw, params, *, kernel_size, padding):
    """Pure-f32 lax.conv reference mirroring PyTorch Conv1d NCW semantics."""
    w1, b1, w2, b2, w3, b3 = params
    dn = jax.lax.conv_dimension_numbers(x_ncw.shape, w1.shape, ("NCH", "OIH", "NCH"))
    h = jax.lax.conv_general_dilated(x_ncw, w1, (1,), [(0, 0)], dimension_numbers=dn)
    h = jax.nn.relu(h + b1[None, :, None])
    dn2 = jax.lax.conv_dimension_numbers(h.shape, w2.shape, ("NCH", "OIH", "NCH"))
    h = jax.lax.conv_general_dilated(h, w2, (1,), [(padding, padding)],
                                     dimension_numbers=dn2)
    h = jax.nn.relu(h + b2[None, :, None])
    dn3 = jax.lax.conv_dimension_numbers(h.shape, w3.shape, ("NCH", "OIH", "NCH"))
    h = jax.lax.conv_general_dilated(h, w3, (1,), [(0, 0)], dimension_numbers=dn3)
    return h + b3[None, :, None]


def _reference_bf16_matched(x_ncw, params, *, kernel_size, padding):
    """Reference with the same bf16-input / f32-accumulate rounding as the kernel."""
    w1, b1, w2, b2, w3, b3 = params
    K, P = kernel_size, padding
    N, Cin, L = x_ncw.shape
    Cb = w1.shape[0]
    L_out = L + 2 * P - K + 1
    bf = jnp.bfloat16

    h1 = jnp.einsum('oc,ncl->nol', w1[:, :, 0].astype(bf), x_ncw.astype(bf),
                    preferred_element_type=jnp.float32)
    h1 = jax.nn.relu(h1 + b1[None, :, None])
    h1p = jnp.pad(h1.astype(bf), ((0, 0), (0, 0), (P, P)))
    w2b = w2.astype(bf)
    h2 = jnp.zeros((N, Cb, L_out), jnp.float32)
    for k in range(K):
        h2 = h2 + jnp.einsum('oc,ncl->nol', w2b[:, :, k], h1p[:, :, k:k + L_out],
                             preferred_element_type=jnp.float32)
    h2 = jax.nn.relu(h2 + b2[None, :, None])
    y = jnp.einsum('oc,ncl->nol', w3[:, :, 0].astype(bf), h2.astype(bf),
                   preferred_element_type=jnp.float32)
    return y + b3[None, :, None]


if __name__ == "__main__":
    # Small shapes consistent with the module: Conv1d input is (N, C, L).
    N, Cin, L = 2, 4, 16
    Cb, Cout = 8, 4
    kernel_size, padding = 3, 1

    key = jax.random.PRNGKey(0)
    keys = jax.random.split(key, 7)
    x = jax.random.normal(keys[0], (N, Cin, L), dtype=jnp.float32)

    # Deterministic synthetic parameters (PyTorch Conv1d weight/bias shapes).
    w1 = jax.random.normal(keys[1], (Cb, Cin, 1), dtype=jnp.float32) * 0.2
    b1 = jax.random.normal(keys[2], (Cb,), dtype=jnp.float32) * 0.1
    w2 = jax.random.normal(keys[3], (Cb, Cb, kernel_size), dtype=jnp.float32) * 0.2
    b2 = jax.random.normal(keys[4], (Cb,), dtype=jnp.float32) * 0.1
    w3 = jax.random.normal(keys[5], (Cout, Cb, 1), dtype=jnp.float32) * 0.2
    b3 = jax.random.normal(keys[6], (Cout,), dtype=jnp.float32) * 0.1
    params = (w1, b1, w2, b2, w3, b3)

    out = bottleneck_forward(x, params, kernel_size=kernel_size, padding=padding)
    out = jax.block_until_ready(out)

    # Tight check vs a reference that uses the same bf16-input / f32-accum math.
    ref_bf16 = _reference_bf16_matched(x, params, kernel_size=kernel_size,
                                       padding=padding)
    assert out.shape == ref_bf16.shape, (out.shape, ref_bf16.shape)
    assert jnp.allclose(out, ref_bf16, atol=1e-3, rtol=1e-3), \
        "mismatch vs bf16-matched reference"

    # Loose semantic check vs the full-f32 Conv1d reference (bf16 MXU rounding).
    ref_f32 = _reference_f32(x, params, kernel_size=kernel_size, padding=padding)
    assert jnp.allclose(out, ref_f32, atol=3e-2, rtol=3e-2), \
        "mismatch vs f32 reference"

    print("KERNEL_OK")
</pallas_src>

<mosaic_0001>
module attributes {stable_mosaic.version = 11 : i64} {
  func.func @_bottleneck_kernel(%arg0: i32, %arg1: i32, %arg2: memref<2x4x128xf32, #tpu.memory_space<vmem>>, %arg3: memref<2x4x128xf32, #tpu.memory_space<vmem>>, %arg4: memref<8x4xbf16, #tpu.memory_space<vmem>>, %arg5: memref<8x1xf32, #tpu.memory_space<vmem>>, %arg6: memref<3x8x8xbf16, #tpu.memory_space<vmem>>, %arg7: memref<8x1xf32, #tpu.memory_space<vmem>>, %arg8: memref<4x8xbf16, #tpu.memory_space<vmem>>, %arg9: memref<4x1xf32, #tpu.memory_space<vmem>>, %arg10: memref<2x4x128xf32, #tpu.memory_space<vmem>>) attributes {dimension_semantics = [#tpu.dimension_semantics<parallel>, #tpu.dimension_semantics<parallel>], iteration_bounds = array<i64: 1, 1>, scalar_prefetch = 0 : i64, scratch_operands = 0 : i64, tpu.core_type = #tpu.core_type<tc>, window_params = [{transform_indices = @transform_0, window_bounds = array<i64: 2, 4, 128>}, {transform_indices = @transform_1, window_bounds = array<i64: 2, 4, 128>}, {pipeline_mode = #tpu.pipeline_mode<synchronous>, transform_indices = @transform_2, window_bounds = array<i64: 8, 4>}, {pipeline_mode = #tpu.pipeline_mode<synchronous>, transform_indices = @transform_3, window_bounds = array<i64: 8, 1>}, {pipeline_mode = #tpu.pipeline_mode<synchronous>, transform_indices = @transform_4, window_bounds = array<i64: 3, 8, 8>}, {pipeline_mode = #tpu.pipeline_mode<synchronous>, transform_indices = @transform_5, window_bounds = array<i64: 8, 1>}, {pipeline_mode = #tpu.pipeline_mode<synchronous>, transform_indices = @transform_6, window_bounds = array<i64: 4, 8>}, {pipeline_mode = #tpu.pipeline_mode<synchronous>, transform_indices = @transform_7, window_bounds = array<i64: 4, 1>}, {transform_indices = @transform_8, window_bounds = array<i64: 2, 4, 128>}]} {
    %c128_i32 = arith.constant 128 : i32
    %0 = arith.muli %arg1, %c128_i32 : i32
    %1 = tpu.iota {dimensions = array<i32: 1>} : vector<8x256xi32>
    %2 = vector.broadcast %0 : i32 to vector<8x256xi32>
    %3 = arith.addi %1, %2 : vector<8x256xi32>
    %c1_i32 = arith.constant 1 : i32
    %4 = vector.broadcast %c1_i32 : i32 to vector<8x256xi32>
    %5 = arith.cmpi sge, %3, %4 : vector<8x256xi32>
    %c17_i32 = arith.constant 17 : i32
    %6 = vector.broadcast %c17_i32 : i32 to vector<8x256xi32>
    %7 = arith.cmpi slt, %3, %6 : vector<8x256xi32>
    %8 = arith.andi %5, %7 : vector<8x256xi1>
    %c0_i32 = arith.constant 0 : i32
    %9 = arith.index_cast %c0_i32 : i32 to index
    %c0 = arith.constant 0 : index
    %c0_0 = arith.constant 0 : index
    %10 = vector.load %arg2[%9, %c0, %c0_0] : memref<2x4x128xf32, #tpu.memory_space<vmem>>, vector<1x4x128xf32>
    %11 = vector.shape_cast %10 : vector<1x4x128xf32> to vector<4x128xf32>
    %12 = arith.index_cast %c0_i32 : i32 to index
    %c0_1 = arith.constant 0 : index
    %c0_2 = arith.constant 0 : index
    %13 = vector.load %arg3[%12, %c0_1, %c0_2] : memref<2x4x128xf32, #tpu.memory_space<vmem>>, vector<1x4x128xf32>
    %14 = vector.shape_cast %13 : vector<1x4x128xf32> to vector<4x128xf32>
    %15 = tpu.concatenate %11, %14 in 1 : vector<4x128xf32>, vector<4x128xf32> -> vector<4x256xf32>
    %16 = arith.truncf %15 : vector<4x256xf32> to vector<4x256xbf16>
    %c0_3 = arith.constant 0 : index
    %c0_4 = arith.constant 0 : index
    %17 = vector.load %arg4[%c0_3, %c0_4] : memref<8x4xbf16, #tpu.memory_space<vmem>>, vector<8x4xbf16>
    %cst = arith.constant dense<0.000000e+00> : vector<8x256xf32>
    %18 = tpu.matmul %17, %16, %cst {dimension_numbers = #tpu.dot_dimension_numbers<[1], [0], [0], [1], [0, 0, 1, 1], [], []>} : vector<8x4xbf16>, vector<4x256xbf16>, vector<8x256xf32> -> vector<8x256xf32>
    %c0_5 = arith.constant 0 : index
    %c0_6 = arith.constant 0 : index
    %19 = vector.load %arg5[%c0_5, %c0_6] : memref<8x1xf32, #tpu.memory_space<vmem>>, vector<8x1xf32>
    %20 = vector.broadcast %19 : vector<8x1xf32> to vector<8x256xf32>
    %21 = arith.addf %18, %20 : vector<8x256xf32>
    %cst_7 = arith.constant 0.000000e+00 : f32
    %22 = vector.broadcast %cst_7 : f32 to vector<8x256xf32>
    %23 = arith.maximumf %21, %22 : vector<8x256xf32>
    %cst_8 = arith.constant 0.000000e+00 : f32
    %24 = vector.broadcast %cst_8 : f32 to vector<8x256xf32>
    %25 = arith.select %8, %23, %24 : vector<8x256xi1>, vector<8x256xf32>
    %c0_9 = arith.constant 0 : index
    %c0_10 = arith.constant 0 : index
    %c0_11 = arith.constant 0 : index
    %26 = vector.load %arg6[%c0_9, %c0_10, %c0_11] : memref<3x8x8xbf16, #tpu.memory_space<vmem>>, vector<1x8x8xbf16>
    %27 = vector.shape_cast %26 : vector<1x8x8xbf16> to vector<8x8xbf16>
    %28 = arith.truncf %25 : vector<8x256xf32> to vector<8x256xbf16>
    %cst_12 = arith.constant dense<0.000000e+00> : vector<8x256xf32>
    %29 = tpu.matmul %27, %28, %cst_12 {dimension_numbers = #tpu.dot_dimension_numbers<[1], [0], [0], [1], [0, 0, 1, 1], [], []>} : vector<8x8xbf16>, vector<8x256xbf16>, vector<8x256xf32> -> vector<8x256xf32>
    %c255_i32 = arith.constant 255 : i32
    %30 = tpu.dynamic_rotate %25 by %c255_i32 dim 1 : vector<8x256xf32>, i32 -> vector<8x256xf32>
    %31 = arith.truncf %30 : vector<8x256xf32> to vector<8x256xbf16>
    %c1 = arith.constant 1 : index
    %c0_13 = arith.constant 0 : index
    %c0_14 = arith.constant 0 : index
    %32 = vector.load %arg6[%c1, %c0_13, %c0_14] : memref<3x8x8xbf16, #tpu.memory_space<vmem>>, vector<1x8x8xbf16>
    %33 = vector.shape_cast %32 : vector<1x8x8xbf16> to vector<8x8xbf16>
    %cst_15 = arith.constant dense<0.000000e+00> : vector<8x256xf32>
    %34 = tpu.matmul %33, %31, %cst_15 {dimension_numbers = #tpu.dot_dimension_numbers<[1], [0], [0], [1], [0, 0, 1, 1], [], []>} : vector<8x8xbf16>, vector<8x256xbf16>, vector<8x256xf32> -> vector<8x256xf32>
    %35 = arith.addf %29, %34 : vector<8x256xf32>
    %c254_i32 = arith.constant 254 : i32
    %36 = tpu.dynamic_rotate %25 by %c254_i32 dim 1 : vector<8x256xf32>, i32 -> vector<8x256xf32>
    %37 = arith.truncf %36 : vector<8x256xf32> to vector<8x256xbf16>
    %c2 = arith.constant 2 : index
    %c0_16 = arith.constant 0 : index
    %c0_17 = arith.constant 0 : index
    %38 = vector.load %arg6[%c2, %c0_16, %c0_17] : memref<3x8x8xbf16, #tpu.memory_space<vmem>>, vector<1x8x8xbf16>
    %39 = vector.shape_cast %38 : vector<1x8x8xbf16> to vector<8x8xbf16>
    %cst_18 = arith.constant dense<0.000000e+00> : vector<8x256xf32>
    %40 = tpu.matmul %39, %37, %cst_18 {dimension_numbers = #tpu.dot_dimension_numbers<[1], [0], [0], [1], [0, 0, 1, 1], [], []>} : vector<8x8xbf16>, vector<8x256xbf16>, vector<8x256xf32> -> vector<8x256xf32>
    %41 = arith.addf %35, %40 : vector<8x256xf32>
    %c0_19 = arith.constant 0 : index
    %c0_20 = arith.constant 0 : index
    %42 = vector.load %arg7[%c0_19, %c0_20] : memref<8x1xf32, #tpu.memory_space<vmem>>, vector<8x1xf32>
    %43 = vector.broadcast %42 : vector<8x1xf32> to vector<8x256xf32>
    %44 = arith.addf %41, %43 : vector<8x256xf32>
    %cst_21 = arith.constant 0.000000e+00 : f32
    %45 = vector.broadcast %cst_21 : f32 to vector<8x256xf32>
    %46 = arith.maximumf %44, %45 : vector<8x256xf32>
    %47 = vector.extract_strided_slice %46 {offsets = [0, 0], sizes = [8, 128], strides = [1, 1]} : vector<8x256xf32> to vector<8x128xf32>
    %48 = arith.truncf %47 : vector<8x128xf32> to vector<8x128xbf16>
    %c0_22 = arith.constant 0 : index
    %c0_23 = arith.constant 0 : index
    %49 = vector.load %arg8[%c0_22, %c0_23] : memref<4x8xbf16, #tpu.memory_space<vmem>>, vector<4x8xbf16>
    %cst_24 = arith.constant dense<0.000000e+00> : vector<4x128xf32>
    %50 = tpu.matmul %49, %48, %cst_24 {dimension_numbers = #tpu.dot_dimension_numbers<[1], [0], [0], [1], [0, 0, 1, 1], [], []>} : vector<4x8xbf16>, vector<8x128xbf16>, vector<4x128xf32> -> vector<4x128xf32>
    %c0_25 = arith.constant 0 : index
    %c0_26 = arith.constant 0 : index
    %51 = vector.load %arg9[%c0_25, %c0_26] : memref<4x1xf32, #tpu.memory_space<vmem>>, vector<4x1xf32>
    %52 = vector.broadcast %51 : vector<4x1xf32> to vector<4x128xf32>
    %53 = arith.addf %50, %52 : vector<4x128xf32>
    %54 = arith.index_cast %c0_i32 : i32 to index
    %c0_27 = arith.constant 0 : index
    %c0_28 = arith.constant 0 : index
    %55 = vector.load %arg10[%54, %c0_27, %c0_28] : memref<2x4x128xf32, #tpu.memory_space<vmem>>, vector<1x4x128xf32>
    %56 = vector.shape_cast %55 : vector<1x4x128xf32> to vector<4x128xf32>
    %57 = vector.shape_cast %53 : vector<4x128xf32> to vector<1x4x128xf32>
    tpu.vector_store %arg10[%54, %c0_27, %c0_28], %57 {strides = array<i32>} : memref<2x4x128xf32, #tpu.memory_space<vmem>>, vector<1x4x128xf32>,
    %c1_i32_29 = arith.constant 1 : i32
    %58 = arith.index_cast %c1_i32_29 : i32 to index
    %c0_30 = arith.constant 0 : index
    %c0_31 = arith.constant 0 : index
    %59 = vector.load %arg2[%58, %c0_30, %c0_31] : memref<2x4x128xf32, #tpu.memory_space<vmem>>, vector<1x4x128xf32>
    %60 = vector.shape_cast %59 : vector<1x4x128xf32> to vector<4x128xf32>
    %61 = arith.index_cast %c1_i32_29 : i32 to index
    %c0_32 = arith.constant 0 : index
    %c0_33 = arith.constant 0 : index
    %62 = vector.load %arg3[%61, %c0_32, %c0_33] : memref<2x4x128xf32, #tpu.memory_space<vmem>>, vector<1x4x128xf32>
    %63 = vector.shape_cast %62 : vector<1x4x128xf32> to vector<4x128xf32>
    %64 = tpu.concatenate %60, %63 in 1 : vector<4x128xf32>, vector<4x128xf32> -> vector<4x256xf32>
    %65 = arith.truncf %64 : vector<4x256xf32> to vector<4x256xbf16>
    %c0_34 = arith.constant 0 : index
    %c0_35 = arith.constant 0 : index
    %66 = vector.load %arg4[%c0_34, %c0_35] : memref<8x4xbf16, #tpu.memory_space<vmem>>, vector<8x4xbf16>
    %cst_36 = arith.constant dense<0.000000e+00> : vector<8x256xf32>
    %67 = tpu.matmul %66, %65, %cst_36 {dimension_numbers = #tpu.dot_dimension_numbers<[1], [0], [0], [1], [0, 0, 1, 1], [], []>} : vector<8x4xbf16>, vector<4x256xbf16>, vector<8x256xf32> -> vector<8x256xf32>
    %c0_37 = arith.constant 0 : index
    %c0_38 = arith.constant 0 : index
    %68 = vector.load %arg5[%c0_37, %c0_38] : memref<8x1xf32, #tpu.memory_space<vmem>>, vector<8x1xf32>
    %69 = vector.broadcast %68 : vector<8x1xf32> to vector<8x256xf32>
    %70 = arith.addf %67, %69 : vector<8x256xf32>
    %cst_39 = arith.constant 0.000000e+00 : f32
    %71 = vector.broadcast %cst_39 : f32 to vector<8x256xf32>
    %72 = arith.maximumf %70, %71 : vector<8x256xf32>
    %cst_40 = arith.constant 0.000000e+00 : f32
    %73 = vector.broadcast %cst_40 : f32 to vector<8x256xf32>
    %74 = arith.select %8, %72, %73 : vector<8x256xi1>, vector<8x256xf32>
    %c0_41 = arith.constant 0 : index
    %c0_42 = arith.constant 0 : index
    %c0_43 = arith.constant 0 : index
    %75 = vector.load %arg6[%c0_41, %c0_42, %c0_43] : memref<3x8x8xbf16, #tpu.memory_space<vmem>>, vector<1x8x8xbf16>
    %76 = vector.shape_cast %75 : vector<1x8x8xbf16> to vector<8x8xbf16>
    %77 = arith.truncf %74 : vector<8x256xf32> to vector<8x256xbf16>
    %cst_44 = arith.constant dense<0.000000e+00> : vector<8x256xf32>
    %78 = tpu.matmul %76, %77, %cst_44 {dimension_numbers = #tpu.dot_dimension_numbers<[1], [0], [0], [1], [0, 0, 1, 1], [], []>} : vector<8x8xbf16>, vector<8x256xbf16>, vector<8x256xf32> -> vector<8x256xf32>
    %c255_i32_45 = arith.constant 255 : i32
    %79 = tpu.dynamic_rotate %74 by %c255_i32_45 dim 1 : vector<8x256xf32>, i32 -> vector<8x256xf32>
    %80 = arith.truncf %79 : vector<8x256xf32> to vector<8x256xbf16>
    %c1_46 = arith.constant 1 : index
    %c0_47 = arith.constant 0 : index
    %c0_48 = arith.constant 0 : index
    %81 = vector.load %arg6[%c1_46, %c0_47, %c0_48] : memref<3x8x8xbf16, #tpu.memory_space<vmem>>, vector<1x8x8xbf16>
    %82 = vector.shape_cast %81 : vector<1x8x8xbf16> to vector<8x8xbf16>
    %cst_49 = arith.constant dense<0.000000e+00> : vector<8x256xf32>
    %83 = tpu.matmul %82, %80, %cst_49 {dimension_numbers = #tpu.dot_dimension_numbers<[1], [0], [0], [1], [0, 0, 1, 1], [], []>} : vector<8x8xbf16>, vector<8x256xbf16>, vector<8x256xf32> -> vector<8x256xf32>
    %84 = arith.addf %78, %83 : vector<8x256xf32>
    %c254_i32_50 = arith.constant 254 : i32
    %85 = tpu.dynamic_rotate %74 by %c254_i32_50 dim 1 : vector<8x256xf32>, i32 -> vector<8x256xf32>
    %86 = arith.truncf %85 : vector<8x256xf32> to vector<8x256xbf16>
    %c2_51 = arith.constant 2 : index
    %c0_52 = arith.constant 0 : index
    %c0_53 = arith.constant 0 : index
    %87 = vector.load %arg6[%c2_51, %c0_52, %c0_53] : memref<3x8x8xbf16, #tpu.memory_space<vmem>>, vector<1x8x8xbf16>
    %88 = vector.shape_cast %87 : vector<1x8x8xbf16> to vector<8x8xbf16>
    %cst_54 = arith.constant dense<0.000000e+00> : vector<8x256xf32>
    %89 = tpu.matmul %88, %86, %cst_54 {dimension_numbers = #tpu.dot_dimension_numbers<[1], [0], [0], [1], [0, 0, 1, 1], [], []>} : vector<8x8xbf16>, vector<8x256xbf16>, vector<8x256xf32> -> vector<8x256xf32>
    %90 = arith.addf %84, %89 : vector<8x256xf32>
    %c0_55 = arith.constant 0 : index
    %c0_56 = arith.constant 0 : index
    %91 = vector.load %arg7[%c0_55, %c0_56] : memref<8x1xf32, #tpu.memory_space<vmem>>, vector<8x1xf32>
    %92 = vector.broadcast %91 : vector<8x1xf32> to vector<8x256xf32>
    %93 = arith.addf %90, %92 : vector<8x256xf32>
    %cst_57 = arith.constant 0.000000e+00 : f32
    %94 = vector.broadcast %cst_57 : f32 to vector<8x256xf32>
    %95 = arith.maximumf %93, %94 : vector<8x256xf32>
    %96 = vector.extract_strided_slice %95 {offsets = [0, 0], sizes = [8, 128], strides = [1, 1]} : vector<8x256xf32> to vector<8x128xf32>
    %97 = arith.truncf %96 : vector<8x128xf32> to vector<8x128xbf16>
    %c0_58 = arith.constant 0 : index
    %c0_59 = arith.constant 0 : index
    %98 = vector.load %arg8[%c0_58, %c0_59] : memref<4x8xbf16, #tpu.memory_space<vmem>>, vector<4x8xbf16>
    %cst_60 = arith.constant dense<0.000000e+00> : vector<4x128xf32>
    %99 = tpu.matmul %98, %97, %cst_60 {dimension_numbers = #tpu.dot_dimension_numbers<[1], [0], [0], [1], [0, 0, 1, 1], [], []>} : vector<4x8xbf16>, vector<8x128xbf16>, vector<4x128xf32> -> vector<4x128xf32>
    %c0_61 = arith.constant 0 : index
    %c0_62 = arith.constant 0 : index
    %100 = vector.load %arg9[%c0_61, %c0_62] : memref<4x1xf32, #tpu.memory_space<vmem>>, vector<4x1xf32>
    %101 = vector.broadcast %100 : vector<4x1xf32> to vector<4x128xf32>
    %102 = arith.addf %99, %101 : vector<4x128xf32>
    %103 = arith.index_cast %c1_i32_29 : i32 to index
    %c0_63 = arith.constant 0 : index
    %c0_64 = arith.constant 0 : index
    %104 = vector.load %arg10[%103, %c0_63, %c0_64] : memref<2x4x128xf32, #tpu.memory_space<vmem>>, vector<1x4x128xf32>
    %105 = vector.shape_cast %104 : vector<1x4x128xf32> to vector<4x128xf32>
    %106 = vector.shape_cast %102 : vector<4x128xf32> to vector<1x4x128xf32>
    tpu.vector_store %arg10[%103, %c0_63, %c0_64], %106 {strides = array<i32>} : memref<2x4x128xf32, #tpu.memory_space<vmem>>, vector<1x4x128xf32>,
    %c2_i32 = arith.constant 2 : i32
    return
  }
  func.func @transform_0(%arg0: i32, %arg1: i32) -> (i32, i32, i32) {
    %c0_i32 = arith.constant 0 : i32
    %c0_i32_0 = arith.constant 0 : i32
    return %arg0, %c0_i32, %arg1 : i32, i32, i32
  }
  func.func @transform_1(%arg0: i32, %arg1: i32) -> (i32, i32, i32) {
    %c1_i32 = arith.constant 1 : i32
    %0 = arith.addi %arg1, %c1_i32 : i32
    %c1_i32_0 = arith.constant 1 : i32
    %1 = arith.muli %0, %c1_i32_0 : i32
    %c0_i32 = arith.constant 0 : i32
    %c0_i32_1 = arith.constant 0 : i32
    return %arg0, %c0_i32, %1 : i32, i32, i32
  }
  func.func @transform_2(%arg0: i32, %arg1: i32) -> (i32, i32) {
    %c0_i32 = arith.constant 0 : i32
    %c0_i32_0 = arith.constant 0 : i32
    %c0_i32_1 = arith.constant 0 : i32
    return %c0_i32, %c0_i32_0 : i32, i32
  }
  func.func @transform_3(%arg0: i32, %arg1: i32) -> (i32, i32) {
    %c0_i32 = arith.constant 0 : i32
    %c0_i32_0 = arith.constant 0 : i32
    %c0_i32_1 = arith.constant 0 : i32
    return %c0_i32, %c0_i32_0 : i32, i32
  }
  func.func @transform_4(%arg0: i32, %arg1: i32) -> (i32, i32, i32) {
    %c0_i32 = arith.constant 0 : i32
    %c0_i32_0 = arith.constant 0 : i32
    %c0_i32_1 = arith.constant 0 : i32
    %c0_i32_2 = arith.constant 0 : i32
    return %c0_i32, %c0_i32_0, %c0_i32_1 : i32, i32, i32
  }
  func.func @transform_5(%arg0: i32, %arg1: i32) -> (i32, i32) {
    %c0_i32 = arith.constant 0 : i32
    %c0_i32_0 = arith.constant 0 : i32
    %c0_i32_1 = arith.constant 0 : i32
    return %c0_i32, %c0_i32_0 : i32, i32
  }
  func.func @transform_6(%arg0: i32, %arg1: i32) -> (i32, i32) {
    %c0_i32 = arith.constant 0 : i32
    %c0_i32_0 = arith.constant 0 : i32
    %c0_i32_1 = arith.constant 0 : i32
    return %c0_i32, %c0_i32_0 : i32, i32
  }
  func.func @transform_7(%arg0: i32, %arg1: i32) -> (i32, i32) {
    %c0_i32 = arith.constant 0 : i32
    %c0_i32_0 = arith.constant 0 : i32
    %c0_i32_1 = arith.constant 0 : i32
    return %c0_i32, %c0_i32_0 : i32, i32
  }
  func.func @transform_8(%arg0: i32, %arg1: i32) -> (i32, i32, i32) {
    %c0_i32 = arith.constant 0 : i32
    %c0_i32_0 = arith.constant 0 : i32
    return %arg0, %c0_i32, %arg1 : i32, i32, i32
  }
}

</mosaic_0001>

<llo_original>
// kernel: tpu_custom_call.1
$region0: #{tpu_custom_call.1}
  #allocation0 [shape = 'u32[]', space=smem, size = 0x4, offset = 0x4, fixed_abs, tag = 'smem constant byte address 0x4 - core index']
  #allocation1 [shape = 'u32[72,128]{1,0:T(1,128)}', space=vmem, size = 0x9000, scoped, tag = 'internal scratch']
  %s0 = inlined_call_operand.vmem [shape: f32[2,4,256], index: 0, kind: input, shape index: {}]
  %s1 = inlined_call_operand.hbm [shape: f32[2,4,256], index: 1, kind: input, shape index: {}]
  %s2 = inlined_call_operand.vmem [shape: bf16[8,4], index: 2, kind: input, shape index: {}]
  %s3 = inlined_call_operand.vmem [shape: f32[8,1], index: 3, kind: input, shape index: {}]
  %s4 = inlined_call_operand.hbm [shape: bf16[3,8,8], index: 4, kind: input, shape index: {}]
  %s5 = inlined_call_operand.vmem [shape: f32[8,1], index: 5, kind: input, shape index: {}]
  %s6 = inlined_call_operand.vmem [shape: bf16[4,8], index: 6, kind: input, shape index: {}]
  %s7 = inlined_call_operand.vmem [shape: f32[4,1], index: 7, kind: input, shape index: {}]
  %s8 = inlined_call_operand.hbm [shape: f32[2,4,128], index: 8, kind: output, shape index: {}]
  %s9 = sld [smem:[#allocation0]]
  $region91: #{tpu_custom_call.1} parent=0
    _
  %s11 = ssub.s32 1, %s9
  %s12 = scalar_select 0, %s11, %s9
  $region1: #{tpu_custom_call.1} parent=0
    #allocation2 [shape = 'u8[4096]{0}', space=vmem, size = 0x1000, scoped, tag = 'input window, operand 0, single buffered']
    #allocation3 [shape = 'u8[4096]{0}', space=vmem, size = 0x1000, scoped, tag = 'input window, operand 1, single buffered']
    #allocation4 [shape = 's32[1]{0}', space=sflag, size = 0x4, scoped, tag = 'scoped memory for tpu_custom_call.1']
    #allocation5 [shape = 's32[1]{0}', space=sflag, size = 0x4, scoped, tag = 'scoped memory for tpu_custom_call.1']
    #allocation6 [shape = 'u8[6144]{0}', space=vmem, size = 0x1800, scoped, tag = 'input window, operand 4, single buffered']
    #allocation7 [shape = 's32[1]{0}', space=sflag, size = 0x4, scoped, tag = 'scoped memory for tpu_custom_call.1']
    #allocation8 [shape = 'u8[4096]{0}', space=vmem, size = 0x1000, scoped, tag = 'output window, operand 0, single buffered']
    %13 = vsyncpa [#allocation4], 0
    %14 = vsyncpa [#allocation7], 0
    %15 = vsyncpa [#allocation5], 0
    // Predicated region
    $region2: #{tpu_custom_call.1} parent=1 // pred_check
      _
    $region3: #{tpu_custom_call.1} parent=1 // pred_check_branch
      %17 = sbr.rel (0) target = $region5
    $region4: #{tpu_custom_call.1} parent=1 // pred_region
      // Predicated region
      $region6: #{tpu_custom_call.1} parent=4 // pred_check
        _
      $region7: #{tpu_custom_call.1} parent=4 // pred_check_branch
        %19 = sbr.rel (0) target = $region9
      $region8: #{tpu_custom_call.1} parent=4 // pred_region
        // Predicated region
        $region10: #{tpu_custom_call.1} parent=8 // pred_check
          _
        $region11: #{tpu_custom_call.1} parent=8 // pred_check_branch
          %21 = sbr.rel target = $region13
        $region12: #{tpu_custom_call.1} parent=8 // pred_region
          // Predicated region
          $region25: #{tpu_custom_call.1} parent=12 // pred_check
            _
          $region26: #{tpu_custom_call.1} parent=12 // pred_check_branch
            %39 = sbr.rel (0) target = $region28
          $region27: #{tpu_custom_call.1} parent=12 // pred_region
            loop: start=0, step=1, limit=1
            $region29: #{tpu_custom_call.1} parent=27 // loop_pre_header
              _
            $region30: #{tpu_custom_call.1} parent=27 // loop_header
              %s41 = sphi 0, %s45
              %p42 = scmp.ge.s32.totalorder %s41, 1
              %s46 = sphi %s0, %s0
              %s47 = sphi [#allocation2], [#allocation2]
            $region31: #{tpu_custom_call.1} parent=27 // loop_header_branch
              %44 = sbr.rel (%p42) target = $region35
            $region32: #{tpu_custom_call.1} parent=27 // loop_body
              _
            $region33: #{tpu_custom_call.1} parent=27 // loop_footer
              %s45 = sadd.s32 1, %s41
            $region34: #{tpu_custom_call.1} parent=27 // loop_footer_branch
              %40 = sbr.rel target = $region30
            $region35: #{tpu_custom_call.1} parent=27 // loop_exit
              _
            %s49 = ssub.s32 16, 1
            loop: start=0, step=1, limit=1
            $region36: #{tpu_custom_call.1} parent=27 // loop_pre_header
              _
            $region37: #{tpu_custom_call.1} parent=27 // loop_header
              %s51 = sphi 0, %s55
              %p52 = scmp.ge.s32.totalorder %s51, 1
              %s56 = sphi %s0, %s0
              %s57 = sphi [#allocation2], [#allocation2]
            $region38: #{tpu_custom_call.1} parent=27 // loop_header_branch
              %54 = sbr.rel (%p52) target = $region42
            $region39: #{tpu_custom_call.1} parent=27 // loop_body
              %v58 = vld [vmem:[%s56] sm:%s49]
              %59 = vst [vmem:[%s57] sm:%s49] %v58
              %v60 = vld [vmem:[%s56 + $0x8] sm:%s49]
              %61 = vst [vmem:[%s57 + $0x4] sm:%s49] %v60
            $region40: #{tpu_custom_call.1} parent=27 // loop_footer
              %s55 = sadd.s32 1, %s51
            $region41: #{tpu_custom_call.1} parent=27 // loop_footer_branch
              %50 = sbr.rel target = $region37
            $region42: #{tpu_custom_call.1} parent=27 // loop_exit
              _
          $region28: #{tpu_custom_call.1} parent=12 // pred_fallthru
            _
        $region13: #{tpu_custom_call.1} parent=8 // pred_fallthru
          _
        // Predicated region
        $region14: #{tpu_custom_call.1} parent=8 // pred_check
          _
        $region15: #{tpu_custom_call.1} parent=8 // pred_check_branch
          %23 = sbr.rel (0) target = $region17
        $region16: #{tpu_custom_call.1} parent=8 // pred_region
          %s25 = ssub.s32 16, 1
          loop: start=0, step=1, limit=1
          $region18: #{tpu_custom_call.1} parent=16 // loop_pre_header
            _
          $region19: #{tpu_custom_call.1} parent=16 // loop_header
            %s27 = sphi 0, %s31
            %p28 = scmp.ge.s32.totalorder %s27, 1
            %s32 = sphi %s0, %s0
            %s33 = sphi [#allocation2], [#allocation2]
          $region20: #{tpu_custom_call.1} parent=16 // loop_header_branch
            %30 = sbr.rel (%p28) target = $region24
          $region21: #{tpu_custom_call.1} parent=16 // loop_body
            %v34 = vld [vmem:[%s32] sm:%s25]
            %35 = vst [vmem:[%s33] sm:%s25] %v34
            %v36 = vld [vmem:[%s32 + $0x8] sm:%s25]
            %37 = vst [vmem:[%s33 + $0x4] sm:%s25] %v36
          $region22: #{tpu_custom_call.1} parent=16 // loop_footer
            %s31 = sadd.s32 1, %s27
          $region23: #{tpu_custom_call.1} parent=16 // loop_footer_branch
            %26 = sbr.rel target = $region19
          $region24: #{tpu_custom_call.1} parent=16 // loop_exit
            _
        $region17: #{tpu_custom_call.1} parent=8 // pred_fallthru
          _
      $region9: #{tpu_custom_call.1} parent=4 // pred_fallthru
        _
      %62 = vnop
    $region5: #{tpu_custom_call.1} parent=1 // pred_fallthru
      _
    // Predicated region
    $region43: #{tpu_custom_call.1} parent=1 // pred_check
      _
    $region44: #{tpu_custom_call.1} parent=1 // pred_check_branch
      %64 = sbr.rel (0) target = $region46
    $region45: #{tpu_custom_call.1} parent=1 // pred_region
      %s65 = sadd.s32 0, 1
      %67 = vsyncadd [#allocation4], 0
      %s68 = smul.addr %s65, 4
      %s69 = scalar_lea.hbm %s1, %s68
      %s70 = sshll.u32 %s69, 4
      %s71 = int_to_ptr.hbm [resolvable:$true] %s70
      %s72 = sshll.u32 [#allocation3], 4
      %s73 = int_to_ptr.vmem [resolvable:$true] %s72
      %78 = dma.hbm_to_vmem [thread:$0]  %s71, 128, %s73, [#allocation4], 128, 64, 4
    $region46: #{tpu_custom_call.1} parent=1 // pred_fallthru
      _
    // Predicated region
    $region47: #{tpu_custom_call.1} parent=1 // pred_check
      _
    $region48: #{tpu_custom_call.1} parent=1 // pred_check_branch
      %80 = sbr.rel (0) target = $region50
    $region49: #{tpu_custom_call.1} parent=1 // pred_region
      _
    $region50: #{tpu_custom_call.1} parent=1 // pred_fallthru
      _
    // Predicated region
    $region51: #{tpu_custom_call.1} parent=1 // pred_check
      _
    $region52: #{tpu_custom_call.1} parent=1 // pred_check_branch
      %82 = sbr.rel (0) target = $region54
    $region53: #{tpu_custom_call.1} parent=1 // pred_region
      _
    $region54: #{tpu_custom_call.1} parent=1 // pred_fallthru
      _
    // Predicated region
    $region55: #{tpu_custom_call.1} parent=1 // pred_check
      _
    $region56: #{tpu_custom_call.1} parent=1 // pred_check_branch
      %84 = sbr.rel (0) target = $region58
    $region57: #{tpu_custom_call.1} parent=1 // pred_region
      %86 = vsyncadd [#allocation7], 0
      %s87 = sshll.u32 %s4, 4
      %s88 = int_to_ptr.hbm [resolvable:$true] %s87
      %s89 = sshll.u32 [#allocation6], 4
      %s90 = int_to_ptr.vmem [resolvable:$true] %s89
      %95 = dma.hbm_to_vmem [thread:$0]  %s88, 192, %s90, [#allocation7], 64, 64, 4
    $region58: #{tpu_custom_call.1} parent=1 // pred_fallthru
      _
    // Predicated region
    $region59: #{tpu_custom_call.1} parent=1 // pred_check
      _
    $region60: #{tpu_custom_call.1} parent=1 // pred_check_branch
      %97 = sbr.rel (0) target = $region62
    $region61: #{tpu_custom_call.1} parent=1 // pred_region
      _
    $region62: #{tpu_custom_call.1} parent=1 // pred_fallthru
      _
    // Predicated region
    $region63: #{tpu_custom_call.1} parent=1 // pred_check
      _
    $region64: #{tpu_custom_call.1} parent=1 // pred_check_branch
      %99 = sbr.rel (0) target = $region66
    $region65: #{tpu_custom_call.1} parent=1 // pred_region
      _
    $region66: #{tpu_custom_call.1} parent=1 // pred_fallthru
      _
    // Predicated region
    $region67: #{tpu_custom_call.1} parent=1 // pred_check
      _
    $region68: #{tpu_custom_call.1} parent=1 // pred_check_branch
      %101 = sbr.rel (0) target = $region70
    $region69: #{tpu_custom_call.1} parent=1 // pred_region
      _
    $region70: #{tpu_custom_call.1} parent=1 // pred_fallthru
      _
    // Predicated region
    $region71: #{tpu_custom_call.1} parent=1 // pred_check
      _
    $region72: #{tpu_custom_call.1} parent=1 // pred_check_branch
      %103 = sbr.rel (0) target = $region74
    $region73: #{tpu_custom_call.1} parent=1 // pred_region
      _
    $region74: #{tpu_custom_call.1} parent=1 // pred_fallthru
      _
    // Predicated region
    $region75: #{tpu_custom_call.1} parent=1 // pred_check
      _
    $region76: #{tpu_custom_call.1} parent=1 // pred_check_branch
      %105 = sbr.rel (0) target = $region78
    $region77: #{tpu_custom_call.1} parent=1 // pred_region
      %107 = dma.done [#allocation4], 128
    $region78: #{tpu_custom_call.1} parent=1 // pred_fallthru
      _
    // Predicated region
    $region79: #{tpu_custom_call.1} parent=1 // pred_check
      _
    $region80: #{tpu_custom_call.1} parent=1 // pred_check_branch
      %109 = sbr.rel (0) target = $region82
    $region81: #{tpu_custom_call.1} parent=1 // pred_region
      %111 = dma.done [#allocation7], 192
    $region82: #{tpu_custom_call.1} parent=1 // pred_fallthru
      _
    %s112 = sadd.s32 0, 1
    %s114 = smul.u32 0, 128
    %v115 = vlaneseq
    %v116 = vand.u32 %v115, 127
    %v117 = vadd.s32 %v116, 128
    %v118 = vstv %s114
    %v119 = vadd.s32 %v116, %v118
    %v120 = vadd.s32 %v117, %v118
    %vm121 = vcmp.ge.s32.totalorder %v119, 1
    %vm122 = vcmp.ge.s32.totalorder %v120, 1
    %vm123 = vcmp.lt.s32.totalorder %v119, 17
    %vm124 = vcmp.lt.s32.totalorder %v120, 17
    %vm125 = vmand %vm121, %vm123
    %vm126 = vmand %vm122, %vm124
    %v127 = vld [vmem:[#allocation2] sm:$0xf]
    %v128 = vld [vmem:[#allocation3] sm:$0xf]
    %v129 = vpack.c.bf16 %v127, %v127
    %v130 = vpack.c.bf16 %v128, %v128
    %v131 = vld [vmem:[%s2] sm:$0xf]
    %v132 = vld [vmem:[%s3] sm:$0xff]
    %134 = vset.pattern.permute.xlu0 0
    %135 = vperm.xlu0 %134, %v132
    %v136 = vpop.permute.xlu0 %135
    %vm138 = vcmask 31744
    %v140 = vsel %vm138, %v131, 0
    %vm142 = vcmask 1041408
    %v144 = vsel %vm142, %v129, 0
    %v147 = vsel %vm142, %v130, 0
    %149 = vmatpush.bf16.msra.mxu0 0
    %150 = vmatpush.bf16.msra.mxu0 0
    %151 = vmatpush.bf16.msra.mxu0 0
    %152 = vmatpush.bf16.msra.mxu0 0
    %153 = vmatpush.bf16.msra.mxu0 0
    %154 = vmatpush.bf16.msra.mxu0 0
    %155 = vmatpush.bf16.msra.mxu0 0
    %156 = vmatpush.bf16.msra.mxu0 %v144
    %157 = vmatmul.bf16.gmra.mxu0 %v140
    %v158 = vpop.f32.mrf.mxu0
    %v159 = vadd.f32 %v136, %v158
    %v160 = vpop.f32.mrf.mxu0
    %161 = vdwg.mxu0
    %162 = vmatpush.bf16.msra.mxu0 0
    %163 = vmatpush.bf16.msra.mxu0 0
    %164 = vmatpush.bf16.msra.mxu0 0
    %165 = vmatpush.bf16.msra.mxu0 0
    %166 = vmatpush.bf16.msra.mxu0 0
    %167 = vmatpush.bf16.msra.mxu0 0
    %168 = vmatpush.bf16.msra.mxu0 0
    %169 = vmatpush.bf16.msra.mxu0 %v147
    %170 = vmatmul.bf16.gmra.mxu0 %v140
    %v171 = vpop.f32.mrf.mxu0
    %v172 = vadd.f32 %v136, %v171
    %v173 = vpop.f32.mrf.mxu0
    %174 = vdwg.mxu0
    %v175 = vmax.f32 %v159, 0.0
    %v176 = vmax.f32 %v172, 0.0
    %v177 = vsel %vm125, %v175, 0.0
    %v178 = vsel %vm126, %v176, 0.0
    %v179 = vld [vmem:[#allocation6] sm:$0xf]
    %v180 = vpack.c.bf16 %v177, %v177
    %181 = vrot.lane.b32.xlu0 %v177, 127
    %v182 = vpop.permute.xlu0 %181
    %183 = vrot.lane.b32.xlu0 %v178, 127
    %v184 = vpop.permute.xlu0 %183
    %vm185 = vcmp.lt.s32.totalorder %v116, 127
    %v186 = vsel %vm185, %v182, %v184
    %v187 = vpack.c.bf16 %v186, %v186
    %s188 = scalar_lea.vmem [#allocation6], 4
    %v189 = vld [vmem:[%s188] sm:$0xf]
    %vm190 = vcmask 64512
    %v192 = vsel %vm190, %v189, 0
    %vm194 = vcmask 1043456
    %v196 = vsel %vm194, %v187, 0
    %198 = vmatpush.bf16.msra.mxu0 0
    %199 = vmatpush.bf16.msra.mxu0 0
    %200 = vmatpush.bf16.msra.mxu0 0
    %201 = vmatpush.bf16.msra.mxu0 0
    %202 = vmatpush.bf16.msra.mxu0 0
    %203 = vmatpush.bf16.msra.mxu0 0
    %204 = vmatpush.bf16.msra.mxu0 0
    %205 = vmatpush.bf16.msra.mxu0 %v196
    %206 = vmatmul.bf16.gmra.mxu0 %v192
    %v207 = vpop.f32.mrf.mxu0
    %v208 = vadd.f32 0.0, %v207
    %v209 = vpop.f32.mrf.mxu0
    %210 = vdwg.mxu0
    %v212 = vsel %vm190, %v179, 0
    %v215 = vsel %vm194, %v180, 0
    %217 = vmatpush.bf16.msra.mxu0 0
    %218 = vmatpush.bf16.msra.mxu0 0
    %219 = vmatpush.bf16.msra.mxu0 0
    %220 = vmatpush.bf16.msra.mxu0 0
    %221 = vmatpush.bf16.msra.mxu0 0
    %222 = vmatpush.bf16.msra.mxu0 0
    %223 = vmatpush.bf16.msra.mxu0 0
    %224 = vmatpush.bf16.msra.mxu0 %v215
    %225 = vmatmul.bf16.gmra.mxu0 %v212
    %v226 = vpop.f32.mrf.mxu0
    %v227 = vadd.f32 %v208, %v226
    %v228 = vpop.f32.mrf.mxu0
    %229 = vdwg.mxu0
    %230 = vrot.lane.b32.xlu0 %v177, 126
    %v231 = vpop.permute.xlu0 %230
    %232 = vrot.lane.b32.xlu0 %v178, 126
    %v233 = vpop.permute.xlu0 %232
    %vm234 = vcmp.lt.s32.totalorder %v116, 126
    %v235 = vsel %vm234, %v231, %v233
    %v236 = vpack.c.bf16 %v235, %v235
    %s237 = scalar_lea.vmem [#allocation6], 8
    %v238 = vld [vmem:[%s237] sm:$0xf]
    %v240 = vsel %vm190, %v238, 0
    %v243 = vsel %vm194, %v236, 0
    %245 = vmatpush.bf16.msra.mxu0 0
    %246 = vmatpush.bf16.msra.mxu0 0
    %247 = vmatpush.bf16.msra.mxu0 0
    %248 = vmatpush.bf16.msra.mxu0 0
    %249 = vmatpush.bf16.msra.mxu0 0
    %250 = vmatpush.bf16.msra.mxu0 0
    %251 = vmatpush.bf16.msra.mxu0 0
    %252 = vmatpush.bf16.msra.mxu0 %v243
    %253 = vmatmul.bf16.gmra.mxu0 %v240
    %v254 = vpop.f32.mrf.mxu0
    %v255 = vadd.f32 0.0, %v254
    %v256 = vpop.f32.mrf.mxu0
    %257 = vdwg.mxu0
    %v258 = vadd.f32 %v227, %v255
    %v259 = vld [vmem:[%s5] sm:$0xff]
    %261 = vset.pattern.permute.xlu0 0
    %262 = vperm.xlu0 %261, %v259
    %v263 = vpop.permute.xlu0 %262
    %v265 = vadd.f32 %v258, %v263
    %v266 = vmax.f32 %v265, 0.0
    %v267 = vpack.c.bf16 %v266, %v266
    %v268 = vld [vmem:[%s6] sm:$0x3]
    %v269 = vld [vmem:[%s7] sm:$0xf]
    %271 = vset.pattern.permute.xlu0 0
    %272 = vperm.xlu0 %271, %v269
    %v273 = vpop.permute.xlu0 %272
    %v276 = vsel %vm190, %v268, 0
    %v279 = vsel %vm194, %v267, 0
    %281 = vmatpush.bf16.msra.mxu0 0
    %282 = vmatpush.bf16.msra.mxu0 0
    %283 = vmatpush.bf16.msra.mxu0 0
    %284 = vmatpush.bf16.msra.mxu0 0
    %285 = vmatpush.bf16.msra.mxu0 0
    %286 = vmatpush.bf16.msra.mxu0 0
    %287 = vmatpush.bf16.msra.mxu0 0
    %288 = vmatpush.bf16.msra.mxu0 %v279
    %289 = vmatmul.bf16.gmra.mxu0 %v276
    %v290 = vpop.f32.mrf.mxu0
    %v291 = vadd.f32 %v273, %v290
    %v292 = vpop.f32.mrf.mxu0
    %293 = vdwg.mxu0
    %294 = vst [vmem:[#allocation8] sm:$0xf] %v291
    %s295 = scalar_lea.vmem [#allocation2], 4
    %v296 = vld [vmem:[%s295] sm:$0xf]
    %s297 = scalar_lea.vmem [#allocation3], 4
    %v298 = vld [vmem:[%s297] sm:$0xf]
    %v299 = vpack.c.bf16 %v296, %v296
    %v300 = vpack.c.bf16 %v298, %v298
    %v301 = vld [vmem:[%s2] sm:$0xf]
    %v302 = vld [vmem:[%s3] sm:$0xff]
    %304 = vset.pattern.permute.xlu0 0
    %305 = vperm.xlu0 %304, %v302
    %v306 = vpop.permute.xlu0 %305
    %v309 = vsel %vm138, %v301, 0
    %v312 = vsel %vm142, %v299, 0
    %v315 = vsel %vm142, %v300, 0
    %317 = vmatpush.bf16.msra.mxu0 0
    %318 = vmatpush.bf16.msra.mxu0 0
    %319 = vmatpush.bf16.msra.mxu0 0
    %320 = vmatpush.bf16.msra.mxu0 0
    %321 = vmatpush.bf16.msra.mxu0 0
    %322 = vmatpush.bf16.msra.mxu0 0
    %323 = vmatpush.bf16.msra.mxu0 0
    %324 = vmatpush.bf16.msra.mxu0 %v312
    %325 = vmatmul.bf16.gmra.mxu0 %v309
    %v326 = vpop.f32.mrf.mxu0
    %v327 = vadd.f32 %v306, %v326
    %v328 = vpop.f32.mrf.mxu0
    %329 = vdwg.mxu0
    %330 = vmatpush.bf16.msra.mxu0 0
    %331 = vmatpush.bf16.msra.mxu0 0
    %332 = vmatpush.bf16.msra.mxu0 0
    %333 = vmatpush.bf16.msra.mxu0 0
    %334 = vmatpush.bf16.msra.mxu0 0
    %335 = vmatpush.bf16.msra.mxu0 0
    %336 = vmatpush.bf16.msra.mxu0 0
    %337 = vmatpush.bf16.msra.mxu0 %v315
    %338 = vmatmul.bf16.gmra.mxu0 %v309
    %v339 = vpop.f32.mrf.mxu0
    %v340 = vadd.f32 %v306, %v339
    %v341 = vpop.f32.mrf.mxu0
    %342 = vdwg.mxu0
    %v343 = vmax.f32 %v327, 0.0
    %v344 = vmax.f32 %v340, 0.0
    %v345 = vsel %vm125, %v343, 0.0
    %v346 = vsel %vm126, %v344, 0.0
    %v347 = vld [vmem:[#allocation6] sm:$0xf]
    %v348 = vpack.c.bf16 %v345, %v345
    %349 = vrot.lane.b32.xlu0 %v345, 127
    %v350 = vpop.permute.xlu0 %349
    %351 = vrot.lane.b32.xlu0 %v346, 127
    %v352 = vpop.permute.xlu0 %351
    %v353 = vsel %vm185, %v350, %v352
    %v354 = vpack.c.bf16 %v353, %v353
    %v355 = vld [vmem:[%s188] sm:$0xf]
    %v357 = vsel %vm190, %v355, 0
    %v360 = vsel %vm194, %v354, 0
    %362 = vmatpush.bf16.msra.mxu0 0
    %363 = vmatpush.bf16.msra.mxu0 0
    %364 = vmatpush.bf16.msra.mxu0 0
    %365 = vmatpush.bf16.msra.mxu0 0
    %366 = vmatpush.bf16.msra.mxu0 0
    %367 = vmatpush.bf16.msra.mxu0 0
    %368 = vmatpush.bf16.msra.mxu0 0
    %369 = vmatpush.bf16.msra.mxu0 %v360
    %370 = vmatmul.bf16.gmra.mxu0 %v357
    %v371 = vpop.f32.mrf.mxu0
    %v372 = vadd.f32 0.0, %v371
    %v373 = vpop.f32.mrf.mxu0
    %374 = vdwg.mxu0
    %v376 = vsel %vm190, %v347, 0
    %v379 = vsel %vm194, %v348, 0
    %381 = vmatpush.bf16.msra.mxu0 0
    %382 = vmatpush.bf16.msra.mxu0 0
    %383 = vmatpush.bf16.msra.mxu0 0
    %384 = vmatpush.bf16.msra.mxu0 0
    %385 = vmatpush.bf16.msra.mxu0 0
    %386 = vmatpush.bf16.msra.mxu0 0
    %387 = vmatpush.bf16.msra.mxu0 0
    %388 = vmatpush.bf16.msra.mxu0 %v379
    %389 = vmatmul.bf16.gmra.mxu0 %v376
    %v390 = vpop.f32.mrf.mxu0
    %v391 = vadd.f32 %v372, %v390
    %v392 = vpop.f32.mrf.mxu0
    %393 = vdwg.mxu0
    %394 = vrot.lane.b32.xlu0 %v345, 126
    %v395 = vpop.permute.xlu0 %394
    %396 = vrot.lane.b32.xlu0 %v346, 126
    %v397 = vpop.permute.xlu0 %396
    %v398 = vsel %vm234, %v395, %v397
    %v399 = vpack.c.bf16 %v398, %v398
    %v400 = vld [vmem:[%s237] sm:$0xf]
    %v402 = vsel %vm190, %v400, 0
    %v405 = vsel %vm194, %v399, 0
    %407 = vmatpush.bf16.msra.mxu0 0
    %408 = vmatpush.bf16.msra.mxu0 0
    %409 = vmatpush.bf16.msra.mxu0 0
    %410 = vmatpush.bf16.msra.mxu0 0
    %411 = vmatpush.bf16.msra.mxu0 0
    %412 = vmatpush.bf16.msra.mxu0 0
    %413 = vmatpush.bf16.msra.mxu0 0
    %414 = vmatpush.bf16.msra.mxu0 %v405
    %415 = vmatmul.bf16.gmra.mxu0 %v402
    %v416 = vpop.f32.mrf.mxu0
    %v417 = vadd.f32 0.0, %v416
    %v418 = vpop.f32.mrf.mxu0
    %419 = vdwg.mxu0
    %v420 = vadd.f32 %v391, %v417
    %v421 = vld [vmem:[%s5] sm:$0xff]
    %423 = vset.pattern.permute.xlu0 0
    %424 = vperm.xlu0 %423, %v421
    %v425 = vpop.permute.xlu0 %424
    %v427 = vadd.f32 %v420, %v425
    %v428 = vmax.f32 %v427, 0.0
    %v429 = vpack.c.bf16 %v428, %v428
    %v430 = vld [vmem:[%s6] sm:$0x3]
    %v431 = vld [vmem:[%s7] sm:$0xf]
    %433 = vset.pattern.permute.xlu0 0
    %434 = vperm.xlu0 %433, %v431
    %v435 = vpop.permute.xlu0 %434
    %v438 = vsel %vm190, %v430, 0
    %v441 = vsel %vm194, %v429, 0
    %443 = vmatpush.bf16.msra.mxu0 0
    %444 = vmatpush.bf16.msra.mxu0 0
    %445 = vmatpush.bf16.msra.mxu0 0
    %446 = vmatpush.bf16.msra.mxu0 0
    %447 = vmatpush.bf16.msra.mxu0 0
    %448 = vmatpush.bf16.msra.mxu0 0
    %449 = vmatpush.bf16.msra.mxu0 0
    %450 = vmatpush.bf16.msra.mxu0 %v441
    %451 = vmatmul.bf16.gmra.mxu0 %v438
    %v452 = vpop.f32.mrf.mxu0
    %v453 = vadd.f32 %v435, %v452
    %v454 = vpop.f32.mrf.mxu0
    %455 = vdwg.mxu0
    %s456 = scalar_lea.vmem [#allocation8], 4
    %457 = vst [vmem:[%s456] sm:$0xf] %v453
    // Predicated region
    $region83: #{tpu_custom_call.1} parent=1 // pred_check
      _
    $region84: #{tpu_custom_call.1} parent=1 // pred_check_branch
      %459 = sbr.rel (0) target = $region86
    $region85: #{tpu_custom_call.1} parent=1 // pred_region
      %461 = vsyncadd [#allocation5], 0
      %s462 = sshll.u32 [#allocation8], 4
      %s463 = int_to_ptr.vmem [resolvable:$true] %s462
      %s464 = sshll.u32 %s8, 4
      %s465 = int_to_ptr.hbm [resolvable:$true] %s464
      %470 = dma.vmem_to_hbm [thread:$0]  %s463, 128, %s465, [#allocation5], 64, 64, 4
    $region86: #{tpu_custom_call.1} parent=1 // pred_fallthru
      _
    // Predicated region
    $region87: #{tpu_custom_call.1} parent=1 // pred_check
      _
    $region88: #{tpu_custom_call.1} parent=1 // pred_check_branch
      %472 = sbr.rel (0) target = $region90
    $region89: #{tpu_custom_call.1} parent=1 // pred_region
      %474 = dma.done [#allocation5], 128
    $region90: #{tpu_custom_call.1} parent=1 // pred_fallthru
      _
    %475 = vsyncpa [#allocation4], 1
    %476 = vsyncpa [#allocation7], 1
    %477 = vsyncpa [#allocation5], 1

</llo_original>
